<compile_context>
chip_gen: v7x
topology: tpu7x:2x2x1
jax: 0.10.0
libtpu: 0.0.40
codegen_flags: <defaults>
</compile_context>

<pallas_src>
import functools

import jax
import jax.numpy as jnp
from jax import lax
from jax.experimental import pallas as pl
from jax.experimental.pallas import tpu as pltpu


def rnn_kernel(x_ref, wi_ref, wh_ref, bh_ref, hist_ref, *, seq, batch, dim_lat):
    """Whole-sequence RNN forward in a single kernel invocation.

    x_ref:    (S*B, Din)   all timesteps, flattened time-major
    wi_ref:   (Dlat, Din)  rnn_i weight, PyTorch nn.Linear layout (no bias)
    wh_ref:   (Dlat, Dlat) rnn_h weight, PyTorch nn.Linear layout
    bh_ref:   (1, Dlat)    rnn_h bias
    hist_ref: (S*B, Dlat)  all hidden states, flattened time-major
    """
    # Hoisted loads: weights / bias read once, not per timestep.
    wi = wi_ref[...]
    wh = wh_ref[...]
    bh = bh_ref[...]

    # nn.Linear is y = x @ W^T + b: contract on the LAST dim of both operands
    # so the wrapper never has to transpose the weights.
    dims_t = (((1,), (1,)), ((), ()))

    # Phase 1: one batched MXU matmul for the input projection of ALL steps
    # (replaces S tiny depth-Din matmuls); bias folded in here.  Entirely off
    # the serial recurrence critical path.
    xwi = lax.dot_general(x_ref[...], wi, dims_t,
                          preferred_element_type=jnp.float32) + bh   # (S*B, Dlat)

    # Phase 2: serial recurrence.  S is small & static -> fully unrolled
    # Python loop so the LLO scheduler sees the whole dependence chain.  Each
    # h_t is stored immediately at a static offset; the store does not feed
    # the next step, so it overlaps with the next h @ Wh^T.
    #
    # TODO(synk): for large S switch to lax.fori_loop(..., unroll=True) over
    # chunks (caps code size / vreg pressure) and chunk the time axis on v7x
    # so full-sequence residency fits its 64 MiB VMEM; a leading 'parallel'
    # grid axis over independent sequences would use v7x's second TensorCore.
    # TODO(synk): weight-stationary Wh via pltpu.matmul_push_rhs/acc_lhs/pop
    # is skipped: the (B,Dlat)x(Dlat,Dlat)=(2,32)x(32,32) operands are far
    # below MXU tile granularity, so the explicit-MXU path is a lowering risk
    # for negligible gain at these shapes.
    h = jnp.zeros((batch, dim_lat), jnp.float32)
    for i in range(seq):
        pre = xwi[i * batch:(i + 1) * batch, :] + lax.dot_general(
            h, wh, dims_t, preferred_element_type=jnp.float32)
        h = jnp.tanh(pre)                      # f32 add + tanh (EUP)
        hist_ref[i * batch:(i + 1) * batch, :] = h.astype(hist_ref.dtype)


def rnn_forward(x, w_i, w_h, b_h):
    """Pallas equivalent of RNN.forward.

    x:   (S, B, Din) float32
    w_i: (Dlat, Din)  -- PyTorch nn.Linear weight layout
    w_h: (Dlat, Dlat)
    b_h: (Dlat,)
    Returns (h_final (B, Dlat), historical_h stacked as (S, B, Dlat)).
    """
    S, B, Din = x.shape
    Dlat = w_i.shape[0]

    x2d = x.reshape(S * B, Din)          # time-major flatten (layout plumbing)
    bh2 = b_h.reshape(1, Dlat)           # (1, Dlat)

    kernel = functools.partial(rnn_kernel, seq=S, batch=B, dim_lat=Dlat)

    # No grid: grid=(1,) with full-array blocks only added the BlockSpec
    # pipeline wrapper overhead.  Everything is tiny -> resident in VMEM.
    hist2d = pl.pallas_call(
        kernel,
        out_shape=jax.ShapeDtypeStruct((S * B, Dlat), jnp.float32),
        in_specs=[pl.BlockSpec(memory_space=pltpu.MemorySpace.VMEM)] * 4,
        out_specs=pl.BlockSpec(memory_space=pltpu.MemorySpace.VMEM),
    )(x2d, w_i, w_h, bh2)

    hist = hist2d.reshape(S, B, Dlat)
    h_fin = hist[-1]                     # final hidden state == last history entry
    return h_fin, hist


def rnn_forward_ref(x, w_i, w_h, b_h):
    """Pure-JAX reference (mirrors the PyTorch loop)."""
    S, B, _ = x.shape
    h = jnp.zeros((B, w_i.shape[0]), dtype=jnp.float32)

    def step(h, x_i):
        h_new = jnp.tanh(x_i @ w_i.T + h @ w_h.T + b_h)
        return h_new, h_new

    h_fin, hist = jax.lax.scan(step, h, x)
    return h_fin, hist


if __name__ == "__main__":
    # Module hyperparameters (dim_out is only used by decode(), not forward()).
    dim_in, dim_lat, dim_out = 4, 32, 3
    seq, batch = 8, 2

    key = jax.random.PRNGKey(0)
    k_x, k_wi, k_wh, k_bh = jax.random.split(key, 4)

    x = jax.random.normal(k_x, (seq, batch, dim_in), dtype=jnp.float32)
    # Deterministic parameter init (PyTorch-like uniform ranges).
    w_i = jax.random.uniform(k_wi, (dim_lat, dim_in), jnp.float32,
                             minval=-1.0 / dim_in ** 0.5, maxval=1.0 / dim_in ** 0.5)
    w_h = jax.random.uniform(k_wh, (dim_lat, dim_lat), jnp.float32,
                             minval=-1.0 / dim_lat ** 0.5, maxval=1.0 / dim_lat ** 0.5)
    b_h = jax.random.uniform(k_bh, (dim_lat,), jnp.float32,
                             minval=-1.0 / dim_lat ** 0.5, maxval=1.0 / dim_lat ** 0.5)

    h_fin, hist = rnn_forward(x, w_i, w_h, b_h)
    jax.block_until_ready((h_fin, hist))

    h_fin_ref, hist_ref_ = rnn_forward_ref(x, w_i, w_h, b_h)
    assert jnp.allclose(h_fin, h_fin_ref, atol=1e-5, rtol=1e-5)
    assert jnp.allclose(hist, hist_ref_, atol=1e-5, rtol=1e-5)
    assert jnp.allclose(hist[-1], h_fin)

    # TODO(synk): RNN.decode() (many-to-one / many-to-many / softmax variants)
    # is not part of forward(); it could be fused as an extra matmul+tanh on
    # the hist buffer inside the same kernel if needed.
    print("KERNEL_OK")
</pallas_src>

<mosaic_0001>
module attributes {stable_mosaic.version = 11 : i64} {
  func.func @rnn_kernel(%arg0: memref<16x4xf32, #tpu.memory_space<vmem>>, %arg1: memref<32x4xf32, #tpu.memory_space<vmem>>, %arg2: memref<32x32xf32, #tpu.memory_space<vmem>>, %arg3: memref<1x32xf32, #tpu.memory_space<vmem>>, %arg4: memref<16x32xf32, #tpu.memory_space<vmem>>) attributes {dimension_semantics = [], scalar_prefetch = 0 : i64, scratch_operands = 0 : i64, tpu.core_type = #tpu.core_type<tc>} {
    %c0 = arith.constant 0 : index
    %c0_0 = arith.constant 0 : index
    %0 = vector.load %arg1[%c0, %c0_0] : memref<32x4xf32, #tpu.memory_space<vmem>>, vector<32x4xf32>
    %c0_1 = arith.constant 0 : index
    %c0_2 = arith.constant 0 : index
    %1 = vector.load %arg2[%c0_1, %c0_2] : memref<32x32xf32, #tpu.memory_space<vmem>>, vector<32x32xf32>
    %c0_3 = arith.constant 0 : index
    %c0_4 = arith.constant 0 : index
    %2 = vector.load %arg3[%c0_3, %c0_4] : memref<1x32xf32, #tpu.memory_space<vmem>>, vector<1x32xf32>
    %c0_5 = arith.constant 0 : index
    %c0_6 = arith.constant 0 : index
    %3 = vector.load %arg0[%c0_5, %c0_6] : memref<16x4xf32, #tpu.memory_space<vmem>>, vector<16x4xf32>
    %cst = arith.constant dense<0.000000e+00> : vector<16x32xf32>
    %4 = tpu.matmul %3, %0, %cst {dimension_numbers = #tpu.dot_dimension_numbers<[1], [1], [0], [0], [0, 0, 1, 0], [], []>} : vector<16x4xf32>, vector<32x4xf32>, vector<16x32xf32> -> vector<16x32xf32>
    %5 = vector.broadcast %2 : vector<1x32xf32> to vector<16x32xf32>
    %6 = arith.addf %4, %5 : vector<16x32xf32>
    %cst_7 = arith.constant 0.000000e+00 : f32
    %7 = vector.broadcast %cst_7 : f32 to vector<2x32xf32>
    %8 = vector.extract_strided_slice %6 {offsets = [0, 0], sizes = [2, 32], strides = [1, 1]} : vector<16x32xf32> to vector<2x32xf32>
    %cst_8 = arith.constant dense<0.000000e+00> : vector<2x32xf32>
    %9 = tpu.matmul %7, %1, %cst_8 {dimension_numbers = #tpu.dot_dimension_numbers<[1], [1], [0], [0], [0, 0, 1, 0], [], []>} : vector<2x32xf32>, vector<32x32xf32>, vector<2x32xf32> -> vector<2x32xf32>
    %10 = arith.addf %8, %9 : vector<2x32xf32>
    %11 = math.tanh %10 : vector<2x32xf32>
    %c0_9 = arith.constant 0 : index
    %c0_10 = arith.constant 0 : index
    %12 = vector.load %arg4[%c0_9, %c0_10] : memref<16x32xf32, #tpu.memory_space<vmem>>, vector<2x32xf32>
    tpu.vector_store %arg4[%c0_9, %c0_10], %11 {strides = array<i32>} : memref<16x32xf32, #tpu.memory_space<vmem>>, vector<2x32xf32>,
    %13 = vector.extract_strided_slice %6 {offsets = [2, 0], sizes = [2, 32], strides = [1, 1]} : vector<16x32xf32> to vector<2x32xf32>
    %cst_11 = arith.constant dense<0.000000e+00> : vector<2x32xf32>
    %14 = tpu.matmul %11, %1, %cst_11 {dimension_numbers = #tpu.dot_dimension_numbers<[1], [1], [0], [0], [0, 0, 1, 0], [], []>} : vector<2x32xf32>, vector<32x32xf32>, vector<2x32xf32> -> vector<2x32xf32>
    %15 = arith.addf %13, %14 : vector<2x32xf32>
    %16 = math.tanh %15 : vector<2x32xf32>
    %c2 = arith.constant 2 : index
    %c0_12 = arith.constant 0 : index
    %17 = vector.load %arg4[%c2, %c0_12] : memref<16x32xf32, #tpu.memory_space<vmem>>, vector<2x32xf32>
    tpu.vector_store %arg4[%c2, %c0_12], %16 {strides = array<i32>} : memref<16x32xf32, #tpu.memory_space<vmem>>, vector<2x32xf32>,
    %18 = vector.extract_strided_slice %6 {offsets = [4, 0], sizes = [2, 32], strides = [1, 1]} : vector<16x32xf32> to vector<2x32xf32>
    %cst_13 = arith.constant dense<0.000000e+00> : vector<2x32xf32>
    %19 = tpu.matmul %16, %1, %cst_13 {dimension_numbers = #tpu.dot_dimension_numbers<[1], [1], [0], [0], [0, 0, 1, 0], [], []>} : vector<2x32xf32>, vector<32x32xf32>, vector<2x32xf32> -> vector<2x32xf32>
    %20 = arith.addf %18, %19 : vector<2x32xf32>
    %21 = math.tanh %20 : vector<2x32xf32>
    %c4 = arith.constant 4 : index
    %c0_14 = arith.constant 0 : index
    %22 = vector.load %arg4[%c4, %c0_14] : memref<16x32xf32, #tpu.memory_space<vmem>>, vector<2x32xf32>
    tpu.vector_store %arg4[%c4, %c0_14], %21 {strides = array<i32>} : memref<16x32xf32, #tpu.memory_space<vmem>>, vector<2x32xf32>,
    %23 = vector.extract_strided_slice %6 {offsets = [6, 0], sizes = [2, 32], strides = [1, 1]} : vector<16x32xf32> to vector<2x32xf32>
    %cst_15 = arith.constant dense<0.000000e+00> : vector<2x32xf32>
    %24 = tpu.matmul %21, %1, %cst_15 {dimension_numbers = #tpu.dot_dimension_numbers<[1], [1], [0], [0], [0, 0, 1, 0], [], []>} : vector<2x32xf32>, vector<32x32xf32>, vector<2x32xf32> -> vector<2x32xf32>
    %25 = arith.addf %23, %24 : vector<2x32xf32>
    %26 = math.tanh %25 : vector<2x32xf32>
    %c6 = arith.constant 6 : index
    %c0_16 = arith.constant 0 : index
    %27 = vector.load %arg4[%c6, %c0_16] : memref<16x32xf32, #tpu.memory_space<vmem>>, vector<2x32xf32>
    tpu.vector_store %arg4[%c6, %c0_16], %26 {strides = array<i32>} : memref<16x32xf32, #tpu.memory_space<vmem>>, vector<2x32xf32>,
    %28 = vector.extract_strided_slice %6 {offsets = [8, 0], sizes = [2, 32], strides = [1, 1]} : vector<16x32xf32> to vector<2x32xf32>
    %cst_17 = arith.constant dense<0.000000e+00> : vector<2x32xf32>
    %29 = tpu.matmul %26, %1, %cst_17 {dimension_numbers = #tpu.dot_dimension_numbers<[1], [1], [0], [0], [0, 0, 1, 0], [], []>} : vector<2x32xf32>, vector<32x32xf32>, vector<2x32xf32> -> vector<2x32xf32>
    %30 = arith.addf %28, %29 : vector<2x32xf32>
    %31 = math.tanh %30 : vector<2x32xf32>
    %c8 = arith.constant 8 : index
    %c0_18 = arith.constant 0 : index
    %32 = vector.load %arg4[%c8, %c0_18] : memref<16x32xf32, #tpu.memory_space<vmem>>, vector<2x32xf32>
    tpu.vector_store %arg4[%c8, %c0_18], %31 {strides = array<i32>} : memref<16x32xf32, #tpu.memory_space<vmem>>, vector<2x32xf32>,
    %33 = vector.extract_strided_slice %6 {offsets = [10, 0], sizes = [2, 32], strides = [1, 1]} : vector<16x32xf32> to vector<2x32xf32>
    %cst_19 = arith.constant dense<0.000000e+00> : vector<2x32xf32>
    %34 = tpu.matmul %31, %1, %cst_19 {dimension_numbers = #tpu.dot_dimension_numbers<[1], [1], [0], [0], [0, 0, 1, 0], [], []>} : vector<2x32xf32>, vector<32x32xf32>, vector<2x32xf32> -> vector<2x32xf32>
    %35 = arith.addf %33, %34 : vector<2x32xf32>
    %36 = math.tanh %35 : vector<2x32xf32>
    %c10 = arith.constant 10 : index
    %c0_20 = arith.constant 0 : index
    %37 = vector.load %arg4[%c10, %c0_20] : memref<16x32xf32, #tpu.memory_space<vmem>>, vector<2x32xf32>
    tpu.vector_store %arg4[%c10, %c0_20], %36 {strides = array<i32>} : memref<16x32xf32, #tpu.memory_space<vmem>>, vector<2x32xf32>,
    %38 = vector.extract_strided_slice %6 {offsets = [12, 0], sizes = [2, 32], strides = [1, 1]} : vector<16x32xf32> to vector<2x32xf32>
    %cst_21 = arith.constant dense<0.000000e+00> : vector<2x32xf32>
    %39 = tpu.matmul %36, %1, %cst_21 {dimension_numbers = #tpu.dot_dimension_numbers<[1], [1], [0], [0], [0, 0, 1, 0], [], []>} : vector<2x32xf32>, vector<32x32xf32>, vector<2x32xf32> -> vector<2x32xf32>
    %40 = arith.addf %38, %39 : vector<2x32xf32>
    %41 = math.tanh %40 : vector<2x32xf32>
    %c12 = arith.constant 12 : index
    %c0_22 = arith.constant 0 : index
    %42 = vector.load %arg4[%c12, %c0_22] : memref<16x32xf32, #tpu.memory_space<vmem>>, vector<2x32xf32>
    tpu.vector_store %arg4[%c12, %c0_22], %41 {strides = array<i32>} : memref<16x32xf32, #tpu.memory_space<vmem>>, vector<2x32xf32>,
    %43 = vector.extract_strided_slice %6 {offsets = [14, 0], sizes = [2, 32], strides = [1, 1]} : vector<16x32xf32> to vector<2x32xf32>
    %cst_23 = arith.constant dense<0.000000e+00> : vector<2x32xf32>
    %44 = tpu.matmul %41, %1, %cst_23 {dimension_numbers = #tpu.dot_dimension_numbers<[1], [1], [0], [0], [0, 0, 1, 0], [], []>} : vector<2x32xf32>, vector<32x32xf32>, vector<2x32xf32> -> vector<2x32xf32>
    %45 = arith.addf %43, %44 : vector<2x32xf32>
    %46 = math.tanh %45 : vector<2x32xf32>
    %c14 = arith.constant 14 : index
    %c0_24 = arith.constant 0 : index
    %47 = vector.load %arg4[%c14, %c0_24] : memref<16x32xf32, #tpu.memory_space<vmem>>, vector<2x32xf32>
    tpu.vector_store %arg4[%c14, %c0_24], %46 {strides = array<i32>} : memref<16x32xf32, #tpu.memory_space<vmem>>, vector<2x32xf32>,
    return
  }
}

</mosaic_0001>

<llo_original>
// kernel: tpu_custom_call.1
$region0: #{tpu_custom_call.1}
  #allocation0 [shape = 'u32[]', space=smem, size = 0x4, offset = 0x4, fixed_abs, tag = 'smem constant byte address 0x4 - core index']
  #allocation1 [shape = 'u32[144,128]{1,0:T(1,128)}', space=vmem, size = 0x12000, scoped, tag = 'internal scratch']
  %s0 = inlined_call_operand.vmem [shape: f32[16,4], index: 0, kind: input, shape index: {}]
  %s1 = inlined_call_operand.vmem [shape: f32[32,4], index: 1, kind: input, shape index: {}]
  %s2 = inlined_call_operand.vmem [shape: f32[32,32], index: 2, kind: input, shape index: {}]
  %s3 = inlined_call_operand.vmem [shape: f32[1,32], index: 3, kind: input, shape index: {}]
  %s4 = inlined_call_operand.hbm [shape: f32[16,32], index: 4, kind: output, shape index: {}]
  %s5 = sld [smem:[#allocation0]]
  $region26: #{tpu_custom_call.1} parent=0
    _
  %s7 = ssub.s32 1, %s5
  %s8 = scalar_select 0, %s7, %s5
  $region1: #{tpu_custom_call.1} parent=0
    #allocation2 [shape = 'u8[8192]{0}', space=vmem, size = 0x2000, scoped, tag = 'output window, operand 0, single buffered']
    #allocation3 [shape = 's32[1]{0}', space=sflag, size = 0x4, scoped, tag = 'scoped memory for tpu_custom_call.1']
    %9 = vsyncpa [#allocation3], 0
    // Predicated region
    $region2: #{tpu_custom_call.1} parent=1 // pred_check
      _
    $region3: #{tpu_custom_call.1} parent=1 // pred_check_branch
      %11 = sbr.rel (0) target = $region5
    $region4: #{tpu_custom_call.1} parent=1 // pred_region
      _
    $region5: #{tpu_custom_call.1} parent=1 // pred_fallthru
      _
    // Predicated region
    $region6: #{tpu_custom_call.1} parent=1 // pred_check
      _
    $region7: #{tpu_custom_call.1} parent=1 // pred_check_branch
      %13 = sbr.rel (0) target = $region9
    $region8: #{tpu_custom_call.1} parent=1 // pred_region
      _
    $region9: #{tpu_custom_call.1} parent=1 // pred_fallthru
      _
    // Predicated region
    $region10: #{tpu_custom_call.1} parent=1 // pred_check
      _
    $region11: #{tpu_custom_call.1} parent=1 // pred_check_branch
      %15 = sbr.rel (0) target = $region13
    $region12: #{tpu_custom_call.1} parent=1 // pred_region
      _
    $region13: #{tpu_custom_call.1} parent=1 // pred_fallthru
      _
    // Predicated region
    $region14: #{tpu_custom_call.1} parent=1 // pred_check
      _
    $region15: #{tpu_custom_call.1} parent=1 // pred_check_branch
      %17 = sbr.rel (0) target = $region17
    $region16: #{tpu_custom_call.1} parent=1 // pred_region
      _
    $region17: #{tpu_custom_call.1} parent=1 // pred_fallthru
      _
    %v18 = vld [vmem:[%s1] sm:$0xff]
    %v19 = vld [vmem:[%s1 + $0x8] sm:$0xff]
    %v20 = vld [vmem:[%s1 + $0x10] sm:$0xff]
    %v21 = vld [vmem:[%s1 + $0x18] sm:$0xff]
    %v22 = vld [vmem:[%s2] sm:$0xff]
    %v23 = vld [vmem:[%s2 + $0x8] sm:$0xff]
    %v24 = vld [vmem:[%s2 + $0x10] sm:$0xff]
    %v25 = vld [vmem:[%s2 + $0x18] sm:$0xff]
    %v26 = vld [vmem:[%s3] sm:$0x1]
    %v27 = vld [vmem:[%s0] sm:$0xff]
    %v28 = vld [vmem:[%s0 + $0x8] sm:$0xff]
    %v30 = vlaneseq
    %v31 = vshrl.u32 %v30, 7
    %v32 = vsub.s32 0, %v31
    %v33 = vrot.slane %v26, %v32
    %vm35 = vcmask 31744
    %v37 = vsel %vm35, %v27, 0
    %v40 = vsel %vm35, %v28, 0
    %v43 = vsel %vm35, %v18, 0
    %v46 = vsel %vm35, %v19, 0
    %v49 = vsel %vm35, %v20, 0
    %v52 = vsel %vm35, %v21, 0
    %54 = vmatprep.subr.mxu0 0.0
    %55 = vmatpush1.xpose.msra.mxu0 %v43
    %56 = vmatprep.subr.mxu0 0.0
    %57 = vmatpush1.xpose.msra.mxu0 %v46
    %58 = vmatprep.subr.mxu0 0.0
    %59 = vmatpush1.xpose.msra.mxu0 %v49
    %60 = vmatprep.subr.mxu0 0.0
    %61 = vmatpush1.xpose.msra.mxu0 %v52
    %62 = vmatprep.subr.mxu0 0.0
    %63 = vmatpush1.xpose.msra.mxu0 0.0
    %64 = vmatprep.subr.mxu0 0.0
    %65 = vmatpush1.xpose.msra.mxu0 0.0
    %66 = vmatprep.subr.mxu0 0.0
    %67 = vmatpush1.xpose.msra.mxu0 0.0
    %68 = vmatprep.subr.mxu0 0.0
    %69 = vmatpush1.xpose.msra.mxu0 0.0
    %70 = vmatprep.subr.mxu0 0.0
    %71 = vmatpush1.xpose.msra.mxu0 0.0
    %72 = vmatprep.subr.mxu0 0.0
    %73 = vmatpush1.xpose.msra.mxu0 0.0
    %74 = vmatprep.subr.mxu0 0.0
    %75 = vmatpush1.xpose.msra.mxu0 0.0
    %76 = vmatprep.subr.mxu0 0.0
    %77 = vmatpush1.xpose.msra.mxu0 0.0
    %78 = vmatprep.subr.mxu0 0.0
    %79 = vmatpush1.xpose.msra.mxu0 0.0
    %80 = vmatprep.subr.mxu0 0.0
    %81 = vmatpush1.xpose.msra.mxu0 0.0
    %82 = vmatprep.subr.mxu0 0.0
    %83 = vmatpush1.xpose.msra.mxu0 0.0
    %84 = vmatprep.subr.mxu0 0.0
    %85 = vmatpush1.xpose.msra.mxu0 0.0
    %86 = vmatprep.subr.mxu0 0.0
    %87 = vmatpush1.xpose.msra.mxu0 0.0
    %88 = vmatprep.subr.mxu0 0.0
    %89 = vmatpush1.xpose.msra.mxu0 0.0
    %90 = vmatprep.subr.mxu0 0.0
    %91 = vmatpush1.xpose.msra.mxu0 0.0
    %92 = vmatprep.subr.mxu0 0.0
    %93 = vmatpush1.xpose.msra.mxu0 0.0
    %94 = vmatprep.subr.mxu0 0.0
    %95 = vmatpush1.xpose.msra.mxu0 0.0
    %96 = vmatprep.subr.mxu0 0.0
    %97 = vmatpush1.xpose.msra.mxu0 0.0
    %98 = vmatprep.subr.mxu0 0.0
    %99 = vmatpush1.xpose.msra.mxu0 0.0
    %100 = vmatprep.subr.mxu0 0.0
    %101 = vmatpush1.xpose.msra.mxu0 0.0
    %102 = vmatprep.subr.mxu0 0.0
    %103 = vmatpush1.xpose.msra.mxu0 0.0
    %104 = vmatprep.subr.mxu0 0.0
    %105 = vmatpush1.xpose.msra.mxu0 0.0
    %106 = vmatprep.subr.mxu0 0.0
    %107 = vmatpush1.xpose.msra.mxu0 0.0
    %108 = vmatprep.subr.mxu0 0.0
    %109 = vmatpush1.xpose.msra.mxu0 0.0
    %110 = vmatprep.subr.mxu0 0.0
    %111 = vmatpush1.xpose.msra.mxu0 0.0
    %112 = vmatprep.subr.mxu0 0.0
    %113 = vmatpush1.xpose.msra.mxu0 0.0
    %114 = vmatprep.subr.mxu0 0.0
    %115 = vmatpush1.xpose.msra.mxu0 0.0
    %116 = vmatprep.subr.mxu0 0.0
    %117 = vmatpush1.xpose.msra.mxu0 0.0
    %118 = vmatprep.mubr.f32.mxu0 0.0
    %119 = vmatmul.mubr.f32.gmra.mrb[0].mxu0 %v37
    %v120 = vpop.f32.mrb[0].mxu0
    %v121 = vadd.f32 %v33, %v120
    %v122 = vpop.f32.mrb[0].mxu0
    %123 = vmatprep.mubr.f32.mxu0 0.0
    %124 = vmatmul.mubr.f32.gmra.mrb[0].mxu0 %v40
    %v125 = vpop.f32.mrb[0].mxu0
    %v126 = vadd.f32 %v33, %v125
    %v127 = vpop.f32.mrb[0].mxu0
    %128 = vdwg.mxu0
    %vm129 = vcmask 261120
    %v131 = vsel %vm129, 0.0, 0
    %v134 = vsel %vm129, %v22, 0
    %v137 = vsel %vm129, %v23, 0
    %v140 = vsel %vm129, %v24, 0
    %v143 = vsel %vm129, %v25, 0
    %145 = vmatprep.subr.mxu0 0.0
    %146 = vmatpush1.xpose.msra.mxu0 %v134
    %147 = vmatprep.subr.mxu0 0.0
    %148 = vmatpush1.xpose.msra.mxu0 %v137
    %149 = vmatprep.subr.mxu0 0.0
    %150 = vmatpush1.xpose.msra.mxu0 %v140
    %151 = vmatprep.subr.mxu0 0.0
    %152 = vmatpush1.xpose.msra.mxu0 %v143
    %153 = vmatprep.subr.mxu0 0.0
    %154 = vmatpush1.xpose.msra.mxu0 0.0
    %155 = vmatprep.subr.mxu0 0.0
    %156 = vmatpush1.xpose.msra.mxu0 0.0
    %157 = vmatprep.subr.mxu0 0.0
    %158 = vmatpush1.xpose.msra.mxu0 0.0
    %159 = vmatprep.subr.mxu0 0.0
    %160 = vmatpush1.xpose.msra.mxu0 0.0
    %161 = vmatprep.subr.mxu0 0.0
    %162 = vmatpush1.xpose.msra.mxu0 0.0
    %163 = vmatprep.subr.mxu0 0.0
    %164 = vmatpush1.xpose.msra.mxu0 0.0
    %165 = vmatprep.subr.mxu0 0.0
    %166 = vmatpush1.xpose.msra.mxu0 0.0
    %167 = vmatprep.subr.mxu0 0.0
    %168 = vmatpush1.xpose.msra.mxu0 0.0
    %169 = vmatprep.subr.mxu0 0.0
    %170 = vmatpush1.xpose.msra.mxu0 0.0
    %171 = vmatprep.subr.mxu0 0.0
    %172 = vmatpush1.xpose.msra.mxu0 0.0
    %173 = vmatprep.subr.mxu0 0.0
    %174 = vmatpush1.xpose.msra.mxu0 0.0
    %175 = vmatprep.subr.mxu0 0.0
    %176 = vmatpush1.xpose.msra.mxu0 0.0
    %177 = vmatprep.subr.mxu0 0.0
    %178 = vmatpush1.xpose.msra.mxu0 0.0
    %179 = vmatprep.subr.mxu0 0.0
    %180 = vmatpush1.xpose.msra.mxu0 0.0
    %181 = vmatprep.subr.mxu0 0.0
    %182 = vmatpush1.xpose.msra.mxu0 0.0
    %183 = vmatprep.subr.mxu0 0.0
    %184 = vmatpush1.xpose.msra.mxu0 0.0
    %185 = vmatprep.subr.mxu0 0.0
    %186 = vmatpush1.xpose.msra.mxu0 0.0
    %187 = vmatprep.subr.mxu0 0.0
    %188 = vmatpush1.xpose.msra.mxu0 0.0
    %189 = vmatprep.subr.mxu0 0.0
    %190 = vmatpush1.xpose.msra.mxu0 0.0
    %191 = vmatprep.subr.mxu0 0.0
    %192 = vmatpush1.xpose.msra.mxu0 0.0
    %193 = vmatprep.subr.mxu0 0.0
    %194 = vmatpush1.xpose.msra.mxu0 0.0
    %195 = vmatprep.subr.mxu0 0.0
    %196 = vmatpush1.xpose.msra.mxu0 0.0
    %197 = vmatprep.subr.mxu0 0.0
    %198 = vmatpush1.xpose.msra.mxu0 0.0
    %199 = vmatprep.subr.mxu0 0.0
    %200 = vmatpush1.xpose.msra.mxu0 0.0
    %201 = vmatprep.subr.mxu0 0.0
    %202 = vmatpush1.xpose.msra.mxu0 0.0
    %203 = vmatprep.subr.mxu0 0.0
    %204 = vmatpush1.xpose.msra.mxu0 0.0
    %205 = vmatprep.subr.mxu0 0.0
    %206 = vmatpush1.xpose.msra.mxu0 0.0
    %207 = vmatprep.subr.mxu0 0.0
    %208 = vmatpush1.xpose.msra.mxu0 0.0
    %209 = vmatprep.mubr.f32.mxu0 0.0
    %210 = vmatmul.mubr.f32.gmra.mrb[0].mxu0 %v131
    %v211 = vpop.f32.mrb[0].mxu0
    %v212 = vadd.f32 0.0, %v211
    %v213 = vpop.f32.mrb[0].mxu0
    %214 = vdwg.mxu0
    %v215 = vadd.f32 %v121, %v212
    %v216 = vtanh.pop %v215
    %vm217 = vcmask 254976
    %218 = vst.msk [vmem:[#allocation2] sm:$0x3] %vm217, %v216
    %v220 = vsel %vm129, %v216, 0
    %222 = vmatprep.subr.mxu0 0.0
    %223 = vmatpush1.xpose.msra.mxu0 %v134
    %224 = vmatprep.subr.mxu0 0.0
    %225 = vmatpush1.xpose.msra.mxu0 %v137
    %226 = vmatprep.subr.mxu0 0.0
    %227 = vmatpush1.xpose.msra.mxu0 %v140
    %228 = vmatprep.subr.mxu0 0.0
    %229 = vmatpush1.xpose.msra.mxu0 %v143
    %230 = vmatprep.subr.mxu0 0.0
    %231 = vmatpush1.xpose.msra.mxu0 0.0
    %232 = vmatprep.subr.mxu0 0.0
    %233 = vmatpush1.xpose.msra.mxu0 0.0
    %234 = vmatprep.subr.mxu0 0.0
    %235 = vmatpush1.xpose.msra.mxu0 0.0
    %236 = vmatprep.subr.mxu0 0.0
    %237 = vmatpush1.xpose.msra.mxu0 0.0
    %238 = vmatprep.subr.mxu0 0.0
    %239 = vmatpush1.xpose.msra.mxu0 0.0
    %240 = vmatprep.subr.mxu0 0.0
    %241 = vmatpush1.xpose.msra.mxu0 0.0
    %242 = vmatprep.subr.mxu0 0.0
    %243 = vmatpush1.xpose.msra.mxu0 0.0
    %244 = vmatprep.subr.mxu0 0.0
    %245 = vmatpush1.xpose.msra.mxu0 0.0
    %246 = vmatprep.subr.mxu0 0.0
    %247 = vmatpush1.xpose.msra.mxu0 0.0
    %248 = vmatprep.subr.mxu0 0.0
    %249 = vmatpush1.xpose.msra.mxu0 0.0
    %250 = vmatprep.subr.mxu0 0.0
    %251 = vmatpush1.xpose.msra.mxu0 0.0
    %252 = vmatprep.subr.mxu0 0.0
    %253 = vmatpush1.xpose.msra.mxu0 0.0
    %254 = vmatprep.subr.mxu0 0.0
    %255 = vmatpush1.xpose.msra.mxu0 0.0
    %256 = vmatprep.subr.mxu0 0.0
    %257 = vmatpush1.xpose.msra.mxu0 0.0
    %258 = vmatprep.subr.mxu0 0.0
    %259 = vmatpush1.xpose.msra.mxu0 0.0
    %260 = vmatprep.subr.mxu0 0.0
    %261 = vmatpush1.xpose.msra.mxu0 0.0
    %262 = vmatprep.subr.mxu0 0.0
    %263 = vmatpush1.xpose.msra.mxu0 0.0
    %264 = vmatprep.subr.mxu0 0.0
    %265 = vmatpush1.xpose.msra.mxu0 0.0
    %266 = vmatprep.subr.mxu0 0.0
    %267 = vmatpush1.xpose.msra.mxu0 0.0
    %268 = vmatprep.subr.mxu0 0.0
    %269 = vmatpush1.xpose.msra.mxu0 0.0
    %270 = vmatprep.subr.mxu0 0.0
    %271 = vmatpush1.xpose.msra.mxu0 0.0
    %272 = vmatprep.subr.mxu0 0.0
    %273 = vmatpush1.xpose.msra.mxu0 0.0
    %274 = vmatprep.subr.mxu0 0.0
    %275 = vmatpush1.xpose.msra.mxu0 0.0
    %276 = vmatprep.subr.mxu0 0.0
    %277 = vmatpush1.xpose.msra.mxu0 0.0
    %278 = vmatprep.subr.mxu0 0.0
    %279 = vmatpush1.xpose.msra.mxu0 0.0
    %280 = vmatprep.subr.mxu0 0.0
    %281 = vmatpush1.xpose.msra.mxu0 0.0
    %282 = vmatprep.subr.mxu0 0.0
    %283 = vmatpush1.xpose.msra.mxu0 0.0
    %284 = vmatprep.subr.mxu0 0.0
    %285 = vmatpush1.xpose.msra.mxu0 0.0
    %286 = vmatprep.mubr.f32.mxu0 0.0
    %287 = vmatmul.mubr.f32.gmra.mrb[0].mxu0 %v220
    %v288 = vpop.f32.mrb[0].mxu0
    %v289 = vadd.f32 0.0, %v288
    %v290 = vpop.f32.mrb[0].mxu0
    %291 = vdwg.mxu0
    %v293 = vrot.slane %v289, 6
    %v295 = vadd.f32 %v121, %v293
    %v296 = vtanh.pop %v295
    %vm297 = vcmask 257026
    %298 = vst.msk [vmem:[#allocation2] sm:$0xc] %vm297, %v296
    %v300 = vrot.slane %v296, 2
    %v301 = vsel %vm129, %v300, 0
    %303 = vmatprep.subr.mxu0 0.0
    %304 = vmatpush1.xpose.msra.mxu0 %v134
    %305 = vmatprep.subr.mxu0 0.0
    %306 = vmatpush1.xpose.msra.mxu0 %v137
    %307 = vmatprep.subr.mxu0 0.0
    %308 = vmatpush1.xpose.msra.mxu0 %v140
    %309 = vmatprep.subr.mxu0 0.0
    %310 = vmatpush1.xpose.msra.mxu0 %v143
    %311 = vmatprep.subr.mxu0 0.0
    %312 = vmatpush1.xpose.msra.mxu0 0.0
    %313 = vmatprep.subr.mxu0 0.0
    %314 = vmatpush1.xpose.msra.mxu0 0.0
    %315 = vmatprep.subr.mxu0 0.0
    %316 = vmatpush1.xpose.msra.mxu0 0.0
    %317 = vmatprep.subr.mxu0 0.0
    %318 = vmatpush1.xpose.msra.mxu0 0.0
    %319 = vmatprep.subr.mxu0 0.0
    %320 = vmatpush1.xpose.msra.mxu0 0.0
    %321 = vmatprep.subr.mxu0 0.0
    %322 = vmatpush1.xpose.msra.mxu0 0.0
    %323 = vmatprep.subr.mxu0 0.0
    %324 = vmatpush1.xpose.msra.mxu0 0.0
    %325 = vmatprep.subr.mxu0 0.0
    %326 = vmatpush1.xpose.msra.mxu0 0.0
    %327 = vmatprep.subr.mxu0 0.0
    %328 = vmatpush1.xpose.msra.mxu0 0.0
    %329 = vmatprep.subr.mxu0 0.0
    %330 = vmatpush1.xpose.msra.mxu0 0.0
    %331 = vmatprep.subr.mxu0 0.0
    %332 = vmatpush1.xpose.msra.mxu0 0.0
    %333 = vmatprep.subr.mxu0 0.0
    %334 = vmatpush1.xpose.msra.mxu0 0.0
    %335 = vmatprep.subr.mxu0 0.0
    %336 = vmatpush1.xpose.msra.mxu0 0.0
    %337 = vmatprep.subr.mxu0 0.0
    %338 = vmatpush1.xpose.msra.mxu0 0.0
    %339 = vmatprep.subr.mxu0 0.0
    %340 = vmatpush1.xpose.msra.mxu0 0.0
    %341 = vmatprep.subr.mxu0 0.0
    %342 = vmatpush1.xpose.msra.mxu0 0.0
    %343 = vmatprep.subr.mxu0 0.0
    %344 = vmatpush1.xpose.msra.mxu0 0.0
    %345 = vmatprep.subr.mxu0 0.0
    %346 = vmatpush1.xpose.msra.mxu0 0.0
    %347 = vmatprep.subr.mxu0 0.0
    %348 = vmatpush1.xpose.msra.mxu0 0.0
    %349 = vmatprep.subr.mxu0 0.0
    %350 = vmatpush1.xpose.msra.mxu0 0.0
    %351 = vmatprep.subr.mxu0 0.0
    %352 = vmatpush1.xpose.msra.mxu0 0.0
    %353 = vmatprep.subr.mxu0 0.0
    %354 = vmatpush1.xpose.msra.mxu0 0.0
    %355 = vmatprep.subr.mxu0 0.0
    %356 = vmatpush1.xpose.msra.mxu0 0.0
    %357 = vmatprep.subr.mxu0 0.0
    %358 = vmatpush1.xpose.msra.mxu0 0.0
    %359 = vmatprep.subr.mxu0 0.0
    %360 = vmatpush1.xpose.msra.mxu0 0.0
    %361 = vmatprep.subr.mxu0 0.0
    %362 = vmatpush1.xpose.msra.mxu0 0.0
    %363 = vmatprep.subr.mxu0 0.0
    %364 = vmatpush1.xpose.msra.mxu0 0.0
    %365 = vmatprep.subr.mxu0 0.0
    %366 = vmatpush1.xpose.msra.mxu0 0.0
    %367 = vmatprep.mubr.f32.mxu0 0.0
    %368 = vmatmul.mubr.f32.gmra.mrb[0].mxu0 %v301
    %v369 = vpop.f32.mrb[0].mxu0
    %v370 = vadd.f32 0.0, %v369
    %v371 = vpop.f32.mrb[0].mxu0
    %372 = vdwg.mxu0
    %v374 = vrot.slane %v370, 4
    %v376 = vadd.f32 %v121, %v374
    %v377 = vtanh.pop %v376
    %vm378 = vcmask 259076
    %379 = vst.msk [vmem:[#allocation2] sm:$0x30] %vm378, %v377
    %v381 = vrot.slane %v377, 4
    %v382 = vsel %vm129, %v381, 0
    %384 = vmatprep.subr.mxu0 0.0
    %385 = vmatpush1.xpose.msra.mxu0 %v134
    %386 = vmatprep.subr.mxu0 0.0
    %387 = vmatpush1.xpose.msra.mxu0 %v137
    %388 = vmatprep.subr.mxu0 0.0
    %389 = vmatpush1.xpose.msra.mxu0 %v140
    %390 = vmatprep.subr.mxu0 0.0
    %391 = vmatpush1.xpose.msra.mxu0 %v143
    %392 = vmatprep.subr.mxu0 0.0
    %393 = vmatpush1.xpose.msra.mxu0 0.0
    %394 = vmatprep.subr.mxu0 0.0
    %395 = vmatpush1.xpose.msra.mxu0 0.0
    %396 = vmatprep.subr.mxu0 0.0
    %397 = vmatpush1.xpose.msra.mxu0 0.0
    %398 = vmatprep.subr.mxu0 0.0
    %399 = vmatpush1.xpose.msra.mxu0 0.0
    %400 = vmatprep.subr.mxu0 0.0
    %401 = vmatpush1.xpose.msra.mxu0 0.0
    %402 = vmatprep.subr.mxu0 0.0
    %403 = vmatpush1.xpose.msra.mxu0 0.0
    %404 = vmatprep.subr.mxu0 0.0
    %405 = vmatpush1.xpose.msra.mxu0 0.0
    %406 = vmatprep.subr.mxu0 0.0
    %407 = vmatpush1.xpose.msra.mxu0 0.0
    %408 = vmatprep.subr.mxu0 0.0
    %409 = vmatpush1.xpose.msra.mxu0 0.0
    %410 = vmatprep.subr.mxu0 0.0
    %411 = vmatpush1.xpose.msra.mxu0 0.0
    %412 = vmatprep.subr.mxu0 0.0
    %413 = vmatpush1.xpose.msra.mxu0 0.0
    %414 = vmatprep.subr.mxu0 0.0
    %415 = vmatpush1.xpose.msra.mxu0 0.0
    %416 = vmatprep.subr.mxu0 0.0
    %417 = vmatpush1.xpose.msra.mxu0 0.0
    %418 = vmatprep.subr.mxu0 0.0
    %419 = vmatpush1.xpose.msra.mxu0 0.0
    %420 = vmatprep.subr.mxu0 0.0
    %421 = vmatpush1.xpose.msra.mxu0 0.0
    %422 = vmatprep.subr.mxu0 0.0
    %423 = vmatpush1.xpose.msra.mxu0 0.0
    %424 = vmatprep.subr.mxu0 0.0
    %425 = vmatpush1.xpose.msra.mxu0 0.0
    %426 = vmatprep.subr.mxu0 0.0
    %427 = vmatpush1.xpose.msra.mxu0 0.0
    %428 = vmatprep.subr.mxu0 0.0
    %429 = vmatpush1.xpose.msra.mxu0 0.0
    %430 = vmatprep.subr.mxu0 0.0
    %431 = vmatpush1.xpose.msra.mxu0 0.0
    %432 = vmatprep.subr.mxu0 0.0
    %433 = vmatpush1.xpose.msra.mxu0 0.0
    %434 = vmatprep.subr.mxu0 0.0
    %435 = vmatpush1.xpose.msra.mxu0 0.0
    %436 = vmatprep.subr.mxu0 0.0
    %437 = vmatpush1.xpose.msra.mxu0 0.0
    %438 = vmatprep.subr.mxu0 0.0
    %439 = vmatpush1.xpose.msra.mxu0 0.0
    %440 = vmatprep.subr.mxu0 0.0
    %441 = vmatpush1.xpose.msra.mxu0 0.0
    %442 = vmatprep.subr.mxu0 0.0
    %443 = vmatpush1.xpose.msra.mxu0 0.0
    %444 = vmatprep.subr.mxu0 0.0
    %445 = vmatpush1.xpose.msra.mxu0 0.0
    %446 = vmatprep.subr.mxu0 0.0
    %447 = vmatpush1.xpose.msra.mxu0 0.0
    %448 = vmatprep.mubr.f32.mxu0 0.0
    %449 = vmatmul.mubr.f32.gmra.mrb[0].mxu0 %v382
    %v450 = vpop.f32.mrb[0].mxu0
    %v451 = vadd.f32 0.0, %v450
    %v452 = vpop.f32.mrb[0].mxu0
    %453 = vdwg.mxu0
    %v455 = vrot.slane %v451, 2
    %v457 = vadd.f32 %v121, %v455
    %v458 = vtanh.pop %v457
    %vm459 = vcmask 261126
    %460 = vst.msk [vmem:[#allocation2] sm:$0xc0] %vm459, %v458
    %v462 = vrot.slane %v458, 6
    %v463 = vsel %vm129, %v462, 0
    %465 = vmatprep.subr.mxu0 0.0
    %466 = vmatpush1.xpose.msra.mxu0 %v134
    %467 = vmatprep.subr.mxu0 0.0
    %468 = vmatpush1.xpose.msra.mxu0 %v137
    %469 = vmatprep.subr.mxu0 0.0
    %470 = vmatpush1.xpose.msra.mxu0 %v140
    %471 = vmatprep.subr.mxu0 0.0
    %472 = vmatpush1.xpose.msra.mxu0 %v143
    %473 = vmatprep.subr.mxu0 0.0
    %474 = vmatpush1.xpose.msra.mxu0 0.0
    %475 = vmatprep.subr.mxu0 0.0
    %476 = vmatpush1.xpose.msra.mxu0 0.0
    %477 = vmatprep.subr.mxu0 0.0
    %478 = vmatpush1.xpose.msra.mxu0 0.0
    %479 = vmatprep.subr.mxu0 0.0
    %480 = vmatpush1.xpose.msra.mxu0 0.0
    %481 = vmatprep.subr.mxu0 0.0
    %482 = vmatpush1.xpose.msra.mxu0 0.0
    %483 = vmatprep.subr.mxu0 0.0
    %484 = vmatpush1.xpose.msra.mxu0 0.0
    %485 = vmatprep.subr.mxu0 0.0
    %486 = vmatpush1.xpose.msra.mxu0 0.0
    %487 = vmatprep.subr.mxu0 0.0
    %488 = vmatpush1.xpose.msra.mxu0 0.0
    %489 = vmatprep.subr.mxu0 0.0
    %490 = vmatpush1.xpose.msra.mxu0 0.0
    %491 = vmatprep.subr.mxu0 0.0
    %492 = vmatpush1.xpose.msra.mxu0 0.0
    %493 = vmatprep.subr.mxu0 0.0
    %494 = vmatpush1.xpose.msra.mxu0 0.0
    %495 = vmatprep.subr.mxu0 0.0
    %496 = vmatpush1.xpose.msra.mxu0 0.0
    %497 = vmatprep.subr.mxu0 0.0
    %498 = vmatpush1.xpose.msra.mxu0 0.0
    %499 = vmatprep.subr.mxu0 0.0
    %500 = vmatpush1.xpose.msra.mxu0 0.0
    %501 = vmatprep.subr.mxu0 0.0
    %502 = vmatpush1.xpose.msra.mxu0 0.0
    %503 = vmatprep.subr.mxu0 0.0
    %504 = vmatpush1.xpose.msra.mxu0 0.0
    %505 = vmatprep.subr.mxu0 0.0
    %506 = vmatpush1.xpose.msra.mxu0 0.0
    %507 = vmatprep.subr.mxu0 0.0
    %508 = vmatpush1.xpose.msra.mxu0 0.0
    %509 = vmatprep.subr.mxu0 0.0
    %510 = vmatpush1.xpose.msra.mxu0 0.0
    %511 = vmatprep.subr.mxu0 0.0
    %512 = vmatpush1.xpose.msra.mxu0 0.0
    %513 = vmatprep.subr.mxu0 0.0
    %514 = vmatpush1.xpose.msra.mxu0 0.0
    %515 = vmatprep.subr.mxu0 0.0
    %516 = vmatpush1.xpose.msra.mxu0 0.0
    %517 = vmatprep.subr.mxu0 0.0
    %518 = vmatpush1.xpose.msra.mxu0 0.0
    %519 = vmatprep.subr.mxu0 0.0
    %520 = vmatpush1.xpose.msra.mxu0 0.0
    %521 = vmatprep.subr.mxu0 0.0
    %522 = vmatpush1.xpose.msra.mxu0 0.0
    %523 = vmatprep.subr.mxu0 0.0
    %524 = vmatpush1.xpose.msra.mxu0 0.0
    %525 = vmatprep.subr.mxu0 0.0
    %526 = vmatpush1.xpose.msra.mxu0 0.0
    %527 = vmatprep.subr.mxu0 0.0
    %528 = vmatpush1.xpose.msra.mxu0 0.0
    %529 = vmatprep.mubr.f32.mxu0 0.0
    %530 = vmatmul.mubr.f32.gmra.mrb[0].mxu0 %v463
    %v531 = vpop.f32.mrb[0].mxu0
    %v532 = vadd.f32 0.0, %v531
    %v533 = vpop.f32.mrb[0].mxu0
    %534 = vdwg.mxu0
    %v535 = vadd.f32 %v126, %v532
    %v536 = vtanh.pop %v535
    %537 = vst.msk [vmem:[#allocation2 + $0x8] sm:$0x3] %vm217, %v536
    %v539 = vsel %vm129, %v536, 0
    %541 = vmatprep.subr.mxu0 0.0
    %542 = vmatpush1.xpose.msra.mxu0 %v134
    %543 = vmatprep.subr.mxu0 0.0
    %544 = vmatpush1.xpose.msra.mxu0 %v137
    %545 = vmatprep.subr.mxu0 0.0
    %546 = vmatpush1.xpose.msra.mxu0 %v140
    %547 = vmatprep.subr.mxu0 0.0
    %548 = vmatpush1.xpose.msra.mxu0 %v143
    %549 = vmatprep.subr.mxu0 0.0
    %550 = vmatpush1.xpose.msra.mxu0 0.0
    %551 = vmatprep.subr.mxu0 0.0
    %552 = vmatpush1.xpose.msra.mxu0 0.0
    %553 = vmatprep.subr.mxu0 0.0
    %554 = vmatpush1.xpose.msra.mxu0 0.0
    %555 = vmatprep.subr.mxu0 0.0
    %556 = vmatpush1.xpose.msra.mxu0 0.0
    %557 = vmatprep.subr.mxu0 0.0
    %558 = vmatpush1.xpose.msra.mxu0 0.0
    %559 = vmatprep.subr.mxu0 0.0
    %560 = vmatpush1.xpose.msra.mxu0 0.0
    %561 = vmatprep.subr.mxu0 0.0
    %562 = vmatpush1.xpose.msra.mxu0 0.0
    %563 = vmatprep.subr.mxu0 0.0
    %564 = vmatpush1.xpose.msra.mxu0 0.0
    %565 = vmatprep.subr.mxu0 0.0
    %566 = vmatpush1.xpose.msra.mxu0 0.0
    %567 = vmatprep.subr.mxu0 0.0
    %568 = vmatpush1.xpose.msra.mxu0 0.0
    %569 = vmatprep.subr.mxu0 0.0
    %570 = vmatpush1.xpose.msra.mxu0 0.0
    %571 = vmatprep.subr.mxu0 0.0
    %572 = vmatpush1.xpose.msra.mxu0 0.0
    %573 = vmatprep.subr.mxu0 0.0
    %574 = vmatpush1.xpose.msra.mxu0 0.0
    %575 = vmatprep.subr.mxu0 0.0
    %576 = vmatpush1.xpose.msra.mxu0 0.0
    %577 = vmatprep.subr.mxu0 0.0
    %578 = vmatpush1.xpose.msra.mxu0 0.0
    %579 = vmatprep.subr.mxu0 0.0
    %580 = vmatpush1.xpose.msra.mxu0 0.0
    %581 = vmatprep.subr.mxu0 0.0
    %582 = vmatpush1.xpose.msra.mxu0 0.0
    %583 = vmatprep.subr.mxu0 0.0
    %584 = vmatpush1.xpose.msra.mxu0 0.0
    %585 = vmatprep.subr.mxu0 0.0
    %586 = vmatpush1.xpose.msra.mxu0 0.0
    %587 = vmatprep.subr.mxu0 0.0
    %588 = vmatpush1.xpose.msra.mxu0 0.0
    %589 = vmatprep.subr.mxu0 0.0
    %590 = vmatpush1.xpose.msra.mxu0 0.0
    %591 = vmatprep.subr.mxu0 0.0
    %592 = vmatpush1.xpose.msra.mxu0 0.0
    %593 = vmatprep.subr.mxu0 0.0
    %594 = vmatpush1.xpose.msra.mxu0 0.0
    %595 = vmatprep.subr.mxu0 0.0
    %596 = vmatpush1.xpose.msra.mxu0 0.0
    %597 = vmatprep.subr.mxu0 0.0
    %598 = vmatpush1.xpose.msra.mxu0 0.0
    %599 = vmatprep.subr.mxu0 0.0
    %600 = vmatpush1.xpose.msra.mxu0 0.0
    %601 = vmatprep.subr.mxu0 0.0
    %602 = vmatpush1.xpose.msra.mxu0 0.0
    %603 = vmatprep.subr.mxu0 0.0
    %604 = vmatpush1.xpose.msra.mxu0 0.0
    %605 = vmatprep.mubr.f32.mxu0 0.0
    %606 = vmatmul.mubr.f32.gmra.mrb[0].mxu0 %v539
    %v607 = vpop.f32.mrb[0].mxu0
    %v608 = vadd.f32 0.0, %v607
    %v609 = vpop.f32.mrb[0].mxu0
    %610 = vdwg.mxu0
    %v612 = vrot.slane %v608, 6
    %v614 = vadd.f32 %v126, %v612
    %v615 = vtanh.pop %v614
    %616 = vst.msk [vmem:[#allocation2 + $0x8] sm:$0xc] %vm297, %v615
    %v618 = vrot.slane %v615, 2
    %v619 = vsel %vm129, %v618, 0
    %621 = vmatprep.subr.mxu0 0.0
    %622 = vmatpush1.xpose.msra.mxu0 %v134
    %623 = vmatprep.subr.mxu0 0.0
    %624 = vmatpush1.xpose.msra.mxu0 %v137
    %625 = vmatprep.subr.mxu0 0.0
    %626 = vmatpush1.xpose.msra.mxu0 %v140
    %627 = vmatprep.subr.mxu0 0.0
    %628 = vmatpush1.xpose.msra.mxu0 %v143
    %629 = vmatprep.subr.mxu0 0.0
    %630 = vmatpush1.xpose.msra.mxu0 0.0
    %631 = vmatprep.subr.mxu0 0.0
    %632 = vmatpush1.xpose.msra.mxu0 0.0
    %633 = vmatprep.subr.mxu0 0.0
    %634 = vmatpush1.xpose.msra.mxu0 0.0
    %635 = vmatprep.subr.mxu0 0.0
    %636 = vmatpush1.xpose.msra.mxu0 0.0
    %637 = vmatprep.subr.mxu0 0.0
    %638 = vmatpush1.xpose.msra.mxu0 0.0
    %639 = vmatprep.subr.mxu0 0.0
    %640 = vmatpush1.xpose.msra.mxu0 0.0
    %641 = vmatprep.subr.mxu0 0.0
    %642 = vmatpush1.xpose.msra.mxu0 0.0
    %643 = vmatprep.subr.mxu0 0.0
    %644 = vmatpush1.xpose.msra.mxu0 0.0
    %645 = vmatprep.subr.mxu0 0.0
    %646 = vmatpush1.xpose.msra.mxu0 0.0
    %647 = vmatprep.subr.mxu0 0.0
    %648 = vmatpush1.xpose.msra.mxu0 0.0
    %649 = vmatprep.subr.mxu0 0.0
    %650 = vmatpush1.xpose.msra.mxu0 0.0
    %651 = vmatprep.subr.mxu0 0.0
    %652 = vmatpush1.xpose.msra.mxu0 0.0
    %653 = vmatprep.subr.mxu0 0.0
    %654 = vmatpush1.xpose.msra.mxu0 0.0
    %655 = vmatprep.subr.mxu0 0.0
    %656 = vmatpush1.xpose.msra.mxu0 0.0
    %657 = vmatprep.subr.mxu0 0.0
    %658 = vmatpush1.xpose.msra.mxu0 0.0
    %659 = vmatprep.subr.mxu0 0.0
    %660 = vmatpush1.xpose.msra.mxu0 0.0
    %661 = vmatprep.subr.mxu0 0.0
    %662 = vmatpush1.xpose.msra.mxu0 0.0
    %663 = vmatprep.subr.mxu0 0.0
    %664 = vmatpush1.xpose.msra.mxu0 0.0
    %665 = vmatprep.subr.mxu0 0.0
    %666 = vmatpush1.xpose.msra.mxu0 0.0
    %667 = vmatprep.subr.mxu0 0.0
    %668 = vmatpush1.xpose.msra.mxu0 0.0
    %669 = vmatprep.subr.mxu0 0.0
    %670 = vmatpush1.xpose.msra.mxu0 0.0
    %671 = vmatprep.subr.mxu0 0.0
    %672 = vmatpush1.xpose.msra.mxu0 0.0
    %673 = vmatprep.subr.mxu0 0.0
    %674 = vmatpush1.xpose.msra.mxu0 0.0
    %675 = vmatprep.subr.mxu0 0.0
    %676 = vmatpush1.xpose.msra.mxu0 0.0
    %677 = vmatprep.subr.mxu0 0.0
    %678 = vmatpush1.xpose.msra.mxu0 0.0
    %679 = vmatprep.subr.mxu0 0.0
    %680 = vmatpush1.xpose.msra.mxu0 0.0
    %681 = vmatprep.subr.mxu0 0.0
    %682 = vmatpush1.xpose.msra.mxu0 0.0
    %683 = vmatprep.subr.mxu0 0.0
    %684 = vmatpush1.xpose.msra.mxu0 0.0
    %685 = vmatprep.mubr.f32.mxu0 0.0
    %686 = vmatmul.mubr.f32.gmra.mrb[0].mxu0 %v619
    %v687 = vpop.f32.mrb[0].mxu0
    %v688 = vadd.f32 0.0, %v687
    %v689 = vpop.f32.mrb[0].mxu0
    %690 = vdwg.mxu0
    %v692 = vrot.slane %v688, 4
    %v694 = vadd.f32 %v126, %v692
    %v695 = vtanh.pop %v694
    %696 = vst.msk [vmem:[#allocation2 + $0x8] sm:$0x30] %vm378, %v695
    %v698 = vrot.slane %v695, 4
    %v699 = vsel %vm129, %v698, 0
    %701 = vmatprep.subr.mxu0 0.0
    %702 = vmatpush1.xpose.msra.mxu0 %v134
    %703 = vmatprep.subr.mxu0 0.0
    %704 = vmatpush1.xpose.msra.mxu0 %v137
    %705 = vmatprep.subr.mxu0 0.0
    %706 = vmatpush1.xpose.msra.mxu0 %v140
    %707 = vmatprep.subr.mxu0 0.0
    %708 = vmatpush1.xpose.msra.mxu0 %v143
    %709 = vmatprep.subr.mxu0 0.0
    %710 = vmatpush1.xpose.msra.mxu0 0.0
    %711 = vmatprep.subr.mxu0 0.0
    %712 = vmatpush1.xpose.msra.mxu0 0.0
    %713 = vmatprep.subr.mxu0 0.0
    %714 = vmatpush1.xpose.msra.mxu0 0.0
    %715 = vmatprep.subr.mxu0 0.0
    %716 = vmatpush1.xpose.msra.mxu0 0.0
    %717 = vmatprep.subr.mxu0 0.0
    %718 = vmatpush1.xpose.msra.mxu0 0.0
    %719 = vmatprep.subr.mxu0 0.0
    %720 = vmatpush1.xpose.msra.mxu0 0.0
    %721 = vmatprep.subr.mxu0 0.0
    %722 = vmatpush1.xpose.msra.mxu0 0.0
    %723 = vmatprep.subr.mxu0 0.0
    %724 = vmatpush1.xpose.msra.mxu0 0.0
    %725 = vmatprep.subr.mxu0 0.0
    %726 = vmatpush1.xpose.msra.mxu0 0.0
    %727 = vmatprep.subr.mxu0 0.0
    %728 = vmatpush1.xpose.msra.mxu0 0.0
    %729 = vmatprep.subr.mxu0 0.0
    %730 = vmatpush1.xpose.msra.mxu0 0.0
    %731 = vmatprep.subr.mxu0 0.0
    %732 = vmatpush1.xpose.msra.mxu0 0.0
    %733 = vmatprep.subr.mxu0 0.0
    %734 = vmatpush1.xpose.msra.mxu0 0.0
    %735 = vmatprep.subr.mxu0 0.0
    %736 = vmatpush1.xpose.msra.mxu0 0.0
    %737 = vmatprep.subr.mxu0 0.0
    %738 = vmatpush1.xpose.msra.mxu0 0.0
    %739 = vmatprep.subr.mxu0 0.0
    %740 = vmatpush1.xpose.msra.mxu0 0.0
    %741 = vmatprep.subr.mxu0 0.0
    %742 = vmatpush1.xpose.msra.mxu0 0.0
    %743 = vmatprep.subr.mxu0 0.0
    %744 = vmatpush1.xpose.msra.mxu0 0.0
    %745 = vmatprep.subr.mxu0 0.0
    %746 = vmatpush1.xpose.msra.mxu0 0.0
    %747 = vmatprep.subr.mxu0 0.0
    %748 = vmatpush1.xpose.msra.mxu0 0.0
    %749 = vmatprep.subr.mxu0 0.0
    %750 = vmatpush1.xpose.msra.mxu0 0.0
    %751 = vmatprep.subr.mxu0 0.0
    %752 = vmatpush1.xpose.msra.mxu0 0.0
    %753 = vmatprep.subr.mxu0 0.0
    %754 = vmatpush1.xpose.msra.mxu0 0.0
    %755 = vmatprep.subr.mxu0 0.0
    %756 = vmatpush1.xpose.msra.mxu0 0.0
    %757 = vmatprep.subr.mxu0 0.0
    %758 = vmatpush1.xpose.msra.mxu0 0.0
    %759 = vmatprep.subr.mxu0 0.0
    %760 = vmatpush1.xpose.msra.mxu0 0.0
    %761 = vmatprep.subr.mxu0 0.0
    %762 = vmatpush1.xpose.msra.mxu0 0.0
    %763 = vmatprep.subr.mxu0 0.0
    %764 = vmatpush1.xpose.msra.mxu0 0.0
    %765 = vmatprep.mubr.f32.mxu0 0.0
    %766 = vmatmul.mubr.f32.gmra.mrb[0].mxu0 %v699
    %v767 = vpop.f32.mrb[0].mxu0
    %v768 = vadd.f32 0.0, %v767
    %v769 = vpop.f32.mrb[0].mxu0
    %770 = vdwg.mxu0
    %v772 = vrot.slane %v768, 2
    %v774 = vadd.f32 %v126, %v772
    %v775 = vtanh.pop %v774
    %776 = vst.msk [vmem:[#allocation2 + $0x8] sm:$0xc0] %vm459, %v775
    // Predicated region
    $region18: #{tpu_custom_call.1} parent=1 // pred_check
      _
    $region19: #{tpu_custom_call.1} parent=1 // pred_check_branch
      %778 = sbr.rel (0) target = $region21
    $region20: #{tpu_custom_call.1} parent=1 // pred_region
      %s780 = ssub.s32 256, 256
      %781 = vsyncadd [#allocation3], %s780
      %s782 = sshll.u32 [#allocation2], 4
      %s783 = int_to_ptr.vmem [resolvable:$true] %s782
      %788 = dma.vmem_to_hbm [thread:$0]  %s783, 256, %s4, [#allocation3], 128, 128, 8
    $region21: #{tpu_custom_call.1} parent=1 // pred_fallthru
      _
    // Predicated region
    $region22: #{tpu_custom_call.1} parent=1 // pred_check
      _
    $region23: #{tpu_custom_call.1} parent=1 // pred_check_branch
      %790 = sbr.rel (0) target = $region25
    $region24: #{tpu_custom_call.1} parent=1 // pred_region
      %791 = dma.done [#allocation3], 256
    $region25: #{tpu_custom_call.1} parent=1 // pred_fallthru
      _
    %792 = vsyncpa [#allocation3], 1

</llo_original>
